<compile_context>
chip_gen: v7x
topology: tpu7x:2x2x1
jax: 0.10.0
libtpu: 0.0.40
codegen_flags: <defaults>
</compile_context>

<pallas_src>
import functools

import jax
import jax.numpy as jnp
from jax.experimental import pallas as pl
from jax.experimental.pallas import tpu as pltpu


_TM_MAX = 256    # multiple of 256 -> fills v6e/v7x 2x256x256 MXU, maps to v5e 4x128x128
_TN_MAX = 512    # lane-dense (multiple of 128) output stores
_TK_MAX = 1024
_LANE = 128


def _round_up(x, m):
    return ((x + m - 1) // m) * m


def _pad2d(a, rows, cols):
    """Zero-pad a 2-D array up to (rows, cols). No copy when already that shape."""
    r, c = a.shape
    if r == rows and c == cols:
        return a
    return jnp.pad(a, ((0, rows - r), (0, cols - c)))


def _pick_tile(dim_padded, max_tile, granule=_LANE):
    """Largest multiple of `granule` <= max_tile that divides dim_padded
    (dim_padded is itself a multiple of `granule`, so this always succeeds)."""
    t = min(max_tile, dim_padded)
    t -= t % granule
    while dim_padded % t:
        t -= granule
    return t


def _nncell_kernel(*refs, has_bias: bool, acc_in_out: bool):
    """One (tm, tn) output tile; grid axis 2 accumulates over K."""
    if acc_in_out:
        if has_bias:
            x_ref, w_ref, b_ref, o_ref = refs
        else:
            x_ref, w_ref, o_ref = refs
            b_ref = None
        acc_ref = o_ref                       # f32 output doubles as the accumulator
    else:
        if has_bias:
            x_ref, w_ref, b_ref, o_ref, acc_ref = refs
        else:
            x_ref, w_ref, o_ref, acc_ref = refs
            b_ref = None

    k = pl.program_id(2)

    @pl.when(k == 0)
    def _init():
        acc_ref[...] = jnp.zeros_like(acc_ref)

    acc_ref[...] += jnp.dot(x_ref[...], w_ref[...],
                            preferred_element_type=jnp.float32)

    if has_bias or not acc_in_out:
        @pl.when(k == pl.num_programs(2) - 1)
        def _finalize():
            if acc_in_out:
                o_ref[...] += b_ref[...]                   # (1, tn) f32 broadcasts
            else:
                acc = acc_ref[...]
                if has_bias:
                    acc = acc + b_ref[...]
                o_ref[...] = acc.astype(o_ref.dtype)


def _nncell_pallas(x, weight, bias_f32, out_dtype, n_valid=None):
    """Tiled matmul (+bias) via pallas_call.

    x:        (M, K) compute-dtype activations.
    weight:   (Kw, Nw) — may already be zero-padded to 128-lane granularity (Kw >= K).
    bias_f32: (N,) / (1, Nw) f32 or None.
    n_valid:  logical N when `weight` is pre-padded.
    """
    M, K = x.shape
    Kw, Nw = weight.shape
    N = Nw if n_valid is None else n_valid
    has_bias = bias_f32 is not None

    compute_itemsize = jnp.dtype(x.dtype).itemsize
    m_gran = {4: 8, 2: 16, 1: 32}.get(compute_itemsize, 8)   # sublane packing per dtype

    # 128-granular padding of K/N minimizes dead bytes on the mem-bound weight stream.
    Kp = _round_up(Kw, _LANE)
    Np = _round_up(Nw, _LANE)
    if M <= _TM_MAX:
        Mp = _round_up(M, m_gran)
        tm = Mp
    else:
        tm = _TM_MAX
        Mp = _round_up(M, tm)
    tk = _pick_tile(Kp, _TK_MAX)
    tn = _pick_tile(Np, _TN_MAX)

    # v7x megacore: guarantee >= 2 "parallel" grid points so the second TensorCore
    # has work (costs at most one extra ~0.35us grid step on 1-TC v5e/v6e).
    if (Mp // tm) * (Np // tn) < 2 and Np >= 2 * _LANE:
        tn = _pick_tile(Np, max(_LANE, (Np // 2) // _LANE * _LANE))

    # Zero padding keeps the matmul exact; no copy for aligned / pre-padded operands.
    xp = _pad2d(x, Mp, Kp)
    wp = _pad2d(weight, Kp, Np)

    grid = (Mp // tm, Np // tn, Kp // tk)
    acc_in_out = jnp.dtype(out_dtype) == jnp.dtype(jnp.float32)

    in_specs = [
        pl.BlockSpec((tm, tk), lambda i, j, k: (i, k)),   # x tile
        pl.BlockSpec((tk, tn), lambda i, j, k: (k, j)),   # weight tile
    ]
    operands = [xp, wp]
    if has_bias:
        bp = _pad2d(bias_f32.reshape(1, -1).astype(jnp.float32), 1, Np)
        in_specs.append(pl.BlockSpec((1, tn), lambda i, j, k: (0, j)))
        operands.append(bp)

    out_itemsize = jnp.dtype(out_dtype).itemsize
    cost = pl.CostEstimate(
        flops=2 * Mp * Kp * Np,
        transcendentals=0,
        bytes_accessed=(xp.size * xp.dtype.itemsize
                        + wp.size * wp.dtype.itemsize
                        + (Np * 4 if has_bias else 0)
                        + Mp * Np * out_itemsize),
    )

    scratch = [] if acc_in_out else [pltpu.VMEM((tm, tn), jnp.float32)]

    out = pl.pallas_call(
        functools.partial(_nncell_kernel, has_bias=has_bias, acc_in_out=acc_in_out),
        out_shape=jax.ShapeDtypeStruct((Mp, Np), out_dtype),
        grid_spec=pltpu.PrefetchScalarGridSpec(
            num_scalar_prefetch=0,
            grid=grid,
            in_specs=in_specs,
            out_specs=pl.BlockSpec((tm, tn), lambda i, j, k: (i, j)),
            scratch_shapes=scratch,
        ),
        compiler_params=pltpu.CompilerParams(
            dimension_semantics=("parallel", "parallel", "arbitrary")),
        cost_estimate=cost,
    )(*operands)

    if Mp == M and Np == N:
        return out
    return out[:M, :N]


@functools.partial(jax.jit, static_argnames=("bias", "use_pallas"))
def nncell_forward(x, weight_ih, bias_ih=None, hstate=None, *,
                   bias=True, use_pallas=None):
    """Pallas implementation of NNCell.forward.

    x:         [B, input_size] or [input_size]
    weight_ih: [input_size, hidden_size], consumed in its storage dtype (pre-cast to
               bf16 once — e.g. via make_nncell — for the bandwidth-bound RNN case).
    bias_ih:   [hidden_size] (only used when bias=True)
    hstate:    accepted but unused, matching the PyTorch forward.
    """
    del hstate
    is_batched = x.ndim == 2
    if not is_batched:
        x = x[None, :]

    M, K = x.shape
    N = weight_ih.shape[1]
    out_dtype = x.dtype   # gate dtype follows the input, as in the PyTorch module

    # If the weight is stored in a narrower compute dtype (e.g. bf16), cast the (much
    # smaller) activation down so the MXU takes the narrow path instead of promoting
    # the weight back to f32.
    w_item = jnp.dtype(weight_ih.dtype).itemsize
    x_c = x.astype(weight_ih.dtype) if w_item < jnp.dtype(x.dtype).itemsize else x

    if use_pallas is None:
        # Memory-bound kernel: route by bytes moved (not flops). Sub-MiB problems go to
        # XLA's fused dot — the pallas fixed grid overhead + (8,128) padding dominates.
        bytes_moved = (M * K * x_c.dtype.itemsize + K * N * w_item
                       + M * N * jnp.dtype(out_dtype).itemsize)
        use_pallas = bytes_moved >= (1 << 20)

    if use_pallas:
        b_f32 = bias_ih.astype(jnp.float32) if bias else None
        gate = _nncell_pallas(x_c, weight_ih, b_f32, out_dtype)
    else:
        gate = jnp.dot(x_c, weight_ih, preferred_element_type=jnp.float32)
        if bias:
            gate = gate + bias_ih.astype(jnp.float32)[None, :]
        gate = gate.astype(out_dtype)

    if not is_batched:
        gate = gate[0]
    return gate


def make_nncell(weight_ih, bias_ih=None, *, bias=True, compute_dtype=None):
    """Build an NNCell step function with the weight cast + zero-pad hoisted out of the
    per-step path (do this once; call the returned function every timestep).

    compute_dtype=jnp.bfloat16 halves the dominant weight HBM traffic; accumulation
    stays f32 on the MXU.
    """
    if compute_dtype is not None:
        weight_ih = weight_ih.astype(compute_dtype)
    K, N = weight_ih.shape
    Kp, Np = _round_up(K, _LANE), _round_up(N, _LANE)
    w_prepared = _pad2d(weight_ih, Kp, Np)                       # padded ONCE, at init
    b_prepared = (_pad2d(bias_ih.astype(jnp.float32).reshape(1, -1), 1, Np)
                  if bias else None)

    @jax.jit
    def forward(x, hstate=None):
        del hstate
        is_batched = x.ndim == 2
        if not is_batched:
            x = x[None, :]
        out_dtype = x.dtype
        if jnp.dtype(w_prepared.dtype).itemsize < jnp.dtype(x.dtype).itemsize:
            x = x.astype(w_prepared.dtype)
        gate = _nncell_pallas(x, w_prepared, b_prepared, out_dtype, n_valid=N)
        if not is_batched:
            gate = gate[0]
        return gate

    return forward


def init_nncell_params(key, input_size, hidden_size):
    # Matches the PyTorch init for c.NONLINEARITY == 'relu':
    #   weight_ih ~ Normal(0, sqrt(2/input_size)), shape (input_size, hidden_size)
    #   bias_ih   = zeros(hidden_size)
    std = jnp.sqrt(2.0 / input_size).astype(jnp.float32)
    weight_ih = std * jax.random.normal(key, (input_size, hidden_size), dtype=jnp.float32)
    bias_ih = jnp.zeros((hidden_size,), dtype=jnp.float32)
    return weight_ih, bias_ih


if __name__ == "__main__":
    key = jax.random.PRNGKey(0)
    k0, k1, k2, k3, k4, k5 = jax.random.split(key, 6)

    def ref_fwd(x, w, b):
        r = jnp.dot(x, w, precision=jax.lax.Precision.HIGHEST)
        return r if b is None else r + b[None, :]

    # 1) Tile-scale f32 problem: exercises the tiled path, direct-f32 accumulation into
    #    o_ref, and the >=2-parallel-grid-points split (grid = (1, 2, 1)).
    B, K, N = 16, 1024, 512
    w1, _ = init_nncell_params(k0, K, N)
    b1 = 0.1 * jax.random.normal(k1, (N,), dtype=jnp.float32)
    x1 = jax.random.normal(k2, (B, K), dtype=jnp.float32)
    gate1 = jax.block_until_ready(nncell_forward(x1, w1, b1, bias=True))
    assert gate1.shape == (B, N)
    assert jnp.allclose(gate1, ref_fwd(x1, w1, b1), atol=1e-3, rtol=1e-3)

    # 1b) bf16-weight path via make_nncell (cast + pad hoisted out of the step).
    cell_bf16 = make_nncell(w1, b1, bias=True, compute_dtype=jnp.bfloat16)
    gate1b = jax.block_until_ready(cell_bf16(x1))
    ref_bf16 = (jnp.dot(x1.astype(jnp.bfloat16), w1.astype(jnp.bfloat16),
                        preferred_element_type=jnp.float32) + b1[None, :])
    assert gate1b.dtype == jnp.float32 and gate1b.shape == (B, N)
    assert jnp.allclose(gate1b, ref_bf16, atol=2e-2, rtol=2e-2)
    assert jnp.allclose(gate1b, ref_fwd(x1, w1, b1), atol=1e-1, rtol=1e-1)

    # 1c) bf16-in / bf16-out: exercises the f32 VMEM scratch + finalize-cast path.
    gate1c = jax.block_until_ready(
        nncell_forward(x1.astype(jnp.bfloat16), w1.astype(jnp.bfloat16), b1,
                       bias=True, use_pallas=True))
    assert gate1c.dtype == jnp.bfloat16
    assert jnp.allclose(gate1c.astype(jnp.float32), ref_bf16, atol=5e-2, rtol=5e-2)

    # 2) Non-128-aligned shapes, forced through Pallas (exercises 128-granular padding).
    B2, K2, N2 = 10, 200, 160
    w2, _ = init_nncell_params(k3, K2, N2)
    b2 = 0.1 * jax.random.normal(k4, (N2,), dtype=jnp.float32)
    x2 = jax.random.normal(k5, (B2, K2), dtype=jnp.float32)
    gate2 = jax.block_until_ready(nncell_forward(x2, w2, b2, bias=True, use_pallas=True))
    assert gate2.shape == (B2, N2)
    assert jnp.allclose(gate2, ref_fwd(x2, w2, b2), atol=1e-3, rtol=1e-3)

    # 2b) Same shapes, bias=False, Pallas path (no finalize branch for f32 outputs).
    gate2nb = jax.block_until_ready(nncell_forward(x2, w2, bias=False, use_pallas=True))
    assert jnp.allclose(gate2nb, ref_fwd(x2, w2, None), atol=1e-3, rtol=1e-3)

    # 2c) make_nncell with pre-padded (non-aligned) weight + n_valid output slicing.
    cell2 = make_nncell(w2, b2, bias=True)
    gate2c = jax.block_until_ready(cell2(x2))
    assert gate2c.shape == (B2, N2)
    assert jnp.allclose(gate2c, ref_fwd(x2, w2, b2), atol=1e-3, rtol=1e-3)

    # 3) Toy module-sized shapes (batch=2, input=16, hidden=32).
    B3, K3, N3 = 2, 16, 32
    w3, b3 = init_nncell_params(k0, K3, N3)
    x3 = jax.random.normal(k1, (B3, K3), dtype=jnp.float32)
    # auto routing -> XLA fast path for sub-MiB problems
    gate3 = jax.block_until_ready(nncell_forward(x3, w3, b3, bias=True))
    assert jnp.allclose(gate3, ref_fwd(x3, w3, b3), atol=1e-4, rtol=1e-4)
    # forced Pallas (single (8,128)-padded tile) must agree too
    gate3p = jax.block_until_ready(nncell_forward(x3, w3, b3, bias=True, use_pallas=True))
    assert jnp.allclose(gate3p, ref_fwd(x3, w3, b3), atol=1e-4, rtol=1e-4)

    # 3b) Unbatched 1-D input path through Pallas.
    gate1d = jax.block_until_ready(nncell_forward(x3[0], w3, b3, bias=True, use_pallas=True))
    assert gate1d.shape == (N3,)
    assert jnp.allclose(gate1d, ref_fwd(x3, w3, b3)[0], atol=1e-4, rtol=1e-4)

    print("KERNEL_OK")
</pallas_src>

<mosaic_0001>
module attributes {stable_mosaic.version = 11 : i64} {
  func.func @_nncell_kernel(%arg0: i32, %arg1: i32, %arg2: i32, %arg3: memref<16x1024xf32, #tpu.memory_space<vmem>>, %arg4: memref<1024x256xf32, #tpu.memory_space<vmem>>, %arg5: memref<1x256xf32, #tpu.memory_space<vmem>>, %arg6: memref<16x256xf32, #tpu.memory_space<vmem>>) attributes {dimension_semantics = [#tpu.dimension_semantics<parallel>, #tpu.dimension_semantics<parallel>, #tpu.dimension_semantics<arbitrary>], iteration_bounds = array<i64: 1, 2, 1>, scalar_prefetch = 0 : i64, scratch_operands = 0 : i64, tpu.core_type = #tpu.core_type<tc>, window_params = [{transform_indices = @transform_0, window_bounds = array<i64: 16, 1024>}, {transform_indices = @transform_1, window_bounds = array<i64: 1024, 256>}, {transform_indices = @transform_2, window_bounds = array<i64: 1, 256>}, {transform_indices = @transform_3, window_bounds = array<i64: 16, 256>}]} {
    %c0_i32 = arith.constant 0 : i32
    %0 = arith.cmpi eq, %arg2, %c0_i32 : i32
    %1 = arith.extui %0 : i1 to i32
    %c0_i32_0 = arith.constant 0 : i32
    %2 = arith.cmpi ne, %1, %c0_i32_0 : i32
    scf.if %2 {
      %cst_10 = arith.constant 0.000000e+00 : f32
      %12 = vector.broadcast %cst_10 : f32 to vector<16x256xf32>
      %c0_11 = arith.constant 0 : index
      %c0_12 = arith.constant 0 : index
      %13 = vector.load %arg6[%c0_11, %c0_12] : memref<16x256xf32, #tpu.memory_space<vmem>>, vector<16x256xf32>
      tpu.vector_store %arg6[%c0_11, %c0_12], %12 {strides = array<i32>} : memref<16x256xf32, #tpu.memory_space<vmem>>, vector<16x256xf32>,
    } else {
    }
    %c0 = arith.constant 0 : index
    %c0_1 = arith.constant 0 : index
    %3 = vector.load %arg6[%c0, %c0_1] : memref<16x256xf32, #tpu.memory_space<vmem>>, vector<16x256xf32>
    %c0_2 = arith.constant 0 : index
    %c0_3 = arith.constant 0 : index
    %4 = vector.load %arg3[%c0_2, %c0_3] : memref<16x1024xf32, #tpu.memory_space<vmem>>, vector<16x1024xf32>
    %c0_4 = arith.constant 0 : index
    %c0_5 = arith.constant 0 : index
    %5 = vector.load %arg4[%c0_4, %c0_5] : memref<1024x256xf32, #tpu.memory_space<vmem>>, vector<1024x256xf32>
    %cst = arith.constant dense<0.000000e+00> : vector<16x256xf32>
    %6 = tpu.matmul %4, %5, %cst {dimension_numbers = #tpu.dot_dimension_numbers<[1], [0], [0], [1], [0, 0, 1, 1], [], []>} : vector<16x1024xf32>, vector<1024x256xf32>, vector<16x256xf32> -> vector<16x256xf32>
    %7 = arith.addf %3, %6 : vector<16x256xf32>
    %c0_6 = arith.constant 0 : index
    %c0_7 = arith.constant 0 : index
    %8 = vector.load %arg6[%c0_6, %c0_7] : memref<16x256xf32, #tpu.memory_space<vmem>>, vector<16x256xf32>
    tpu.vector_store %arg6[%c0_6, %c0_7], %7 {strides = array<i32>} : memref<16x256xf32, #tpu.memory_space<vmem>>, vector<16x256xf32>,
    %c0_i32_8 = arith.constant 0 : i32
    %9 = arith.cmpi eq, %arg2, %c0_i32_8 : i32
    %10 = arith.extui %9 : i1 to i32
    %c0_i32_9 = arith.constant 0 : i32
    %11 = arith.cmpi ne, %10, %c0_i32_9 : i32
    scf.if %11 {
      %c0_10 = arith.constant 0 : index
      %c0_11 = arith.constant 0 : index
      %12 = vector.load %arg6[%c0_10, %c0_11] : memref<16x256xf32, #tpu.memory_space<vmem>>, vector<16x256xf32>
      %c0_12 = arith.constant 0 : index
      %c0_13 = arith.constant 0 : index
      %13 = vector.load %arg5[%c0_12, %c0_13] : memref<1x256xf32, #tpu.memory_space<vmem>>, vector<1x256xf32>
      %14 = vector.broadcast %13 : vector<1x256xf32> to vector<16x256xf32>
      %15 = arith.addf %12, %14 : vector<16x256xf32>
      %c0_14 = arith.constant 0 : index
      %c0_15 = arith.constant 0 : index
      %16 = vector.load %arg6[%c0_14, %c0_15] : memref<16x256xf32, #tpu.memory_space<vmem>>, vector<16x256xf32>
      tpu.vector_store %arg6[%c0_14, %c0_15], %15 {strides = array<i32>} : memref<16x256xf32, #tpu.memory_space<vmem>>, vector<16x256xf32>,
    } else {
    }
    return
  }
  func.func @transform_0(%arg0: i32, %arg1: i32, %arg2: i32) -> (i32, i32) {
    %c0_i32 = arith.constant 0 : i32
    return %arg0, %arg2 : i32, i32
  }
  func.func @transform_1(%arg0: i32, %arg1: i32, %arg2: i32) -> (i32, i32) {
    %c0_i32 = arith.constant 0 : i32
    return %arg2, %arg1 : i32, i32
  }
  func.func @transform_2(%arg0: i32, %arg1: i32, %arg2: i32) -> (i32, i32) {
    %c0_i32 = arith.constant 0 : i32
    %c0_i32_0 = arith.constant 0 : i32
    return %c0_i32, %arg1 : i32, i32
  }
  func.func @transform_3(%arg0: i32, %arg1: i32, %arg2: i32) -> (i32, i32) {
    %c0_i32 = arith.constant 0 : i32
    return %arg0, %arg1 : i32, i32
  }
}

</mosaic_0001>

<llo_original>
// kernel: nncell_forward.1
$region0: #{nncell_forward.1}
  #allocation0 [shape = 'u32[]', space=smem, size = 0x4, offset = 0x4, fixed_abs, tag = 'smem constant byte address 0x4 - core index']
  #allocation1 [shape = 'u32[144,128]{1,0:T(1,128)}', space=vmem, size = 0x12000, scoped, tag = 'internal scratch']
  %s0 = inlined_call_operand.hbm [shape: f32[16,1024], index: 0, kind: input, shape index: {}]
  %s1 = inlined_call_operand.hbm [shape: f32[1024,512], index: 1, kind: input, shape index: {}]
  %s2 = inlined_call_operand.hbm [shape: f32[1,512], index: 2, kind: input, shape index: {}]
  %s3 = inlined_call_operand.hbm [shape: f32[16,512], index: 3, kind: output, shape index: {}]
  %s4 = sld [smem:[#allocation0]]
  $region65: #{nncell_forward.1} parent=0
    _
  %s6 = ssub.s32 1, %s4
  %s7 = scalar_select 0, %s6, %s4
  $region1: #{nncell_forward.1} parent=0
    #allocation2 [shape = 'u8[65536]{0}', space=vmem, size = 0x10000, scoped, tag = 'input window, operand 0, single buffered']
    #allocation3 [shape = 's32[2]{0}', space=sflag, size = 0x8, scoped, tag = 'scoped memory for nncell_forward.1']
    #allocation4 [shape = 's32[2]{0}', space=sflag, size = 0x8, scoped, tag = 'scoped memory for nncell_forward.1']
    #allocation5 [shape = 'u8[2097152]{0}', space=vmem, size = 0x200000, scoped, tag = 'input window, operand 1']
    #allocation6 [shape = 's32[2]{0}', space=sflag, size = 0x8, scoped, tag = 'scoped memory for nncell_forward.1']
    #allocation7 [shape = 'u8[2048]{0}', space=vmem, size = 0x800, scoped, tag = 'input window, operand 2']
    #allocation8 [shape = 'u8[32768]{0}', space=vmem, size = 0x8000, scoped, tag = 'output window, operand 0']
    %8 = vsyncpa [#allocation3], 0
    %9 = vsyncpa [#allocation6], 0
    %s10 = scalar_lea.sflag [#allocation6], 1
    %11 = vsyncpa %s10, 0
    %12 = vsyncpa [#allocation4], 0
    %s13 = scalar_lea.sflag [#allocation4], 1
    %14 = vsyncpa %s13, 0
    loop: start=0, step=1, limit=4
    $region2: #{nncell_forward.1} parent=1 // loop_pre_header
      _
    $region3: #{nncell_forward.1} parent=1 // loop_header
      %s16 = sphi 0, %s20
      %p17 = scmp.ge.s32.totalorder %s16, 4
      %s23 = sphi 0, %s42
      %s24 = sphi 0, %s38
      %s25 = sphi 0, %s34
      %s26 = sphi 0, %s23
      %s27 = sphi 0, %s24
      %s28 = sphi 0, %s25
      %s29 = sphi 0, %s26
      %s30 = sphi 0, %s27
      %s31 = sphi 0, %s28
      %s47 = sphi 0, %s49
      %s50 = sphi 0, %s47
      %s51 = sphi 0, %s50
      %s67 = sphi 0, %s51
      %s75 = sphi 0, %s77
      %s78 = sphi 0, %s75
      %s79 = sphi 0, %s78
      %s95 = sphi 0, %s79
      %s101 = sphi 0, %s103
      %s104 = sphi 0, %s101
      %s105 = sphi 0, %s104
      %s121 = sphi 0, %s105
      %s129 = sphi 0, %s131
      %s132 = sphi 0, %s129
      %s133 = sphi 0, %s132
      %s149 = sphi 0, %s133
    $region4: #{nncell_forward.1} parent=1 // loop_header_branch
      %19 = sbr.rel (%p17) target = $region8
    $region5: #{nncell_forward.1} parent=1 // loop_body
      %s21 = ssub.s32 %s16, 1
      %s22 = ssub.s32 %s16, 2
      %s32 = sadd.s32 1, %s25
      %p33 = scmp.ge.s32.totalorder %s32, 1
      %s34 = scalar_select %p33, 0, %s32
      %s35 = sadd.s32 1, %s24
      %s36 = scalar_select %p33, %s35, %s24
      %p37 = scmp.ge.s32.totalorder %s36, 2
      %s38 = scalar_select %p37, 0, %s36
      %s39 = sadd.s32 1, %s23
      %s40 = scalar_select %p37, %s39, %s23
      %p41 = scmp.ge.s32.totalorder %s40, 1
      %s42 = scalar_select %p41, 0, %s40
      %s43 = ssub.s32 %s23, %s42
      %s44 = ssub.s32 %s25, %s34
      %s45 = sor.u32 %s43, %s44
      %p46 = scmp.eq.s32.totalorder %s45, 0
      %s48 = sadd.s32 %s47, 1
      %s49 = scalar_select %p46, %s47, %s48
      %p52 = pneg %p46
      %p53 = scmp.eq.s32.totalorder %s16, 1
      %p54 = por %p52, %p53
      %p55 = scmp.ne.s32.totalorder %s47, %s50
      %p56 = scmp.eq.s32.totalorder %s16, 0
      %p57 = por %p55, %p56
      %p58 = scmp.ne.s32.totalorder %s47, %s50
      %p59 = scmp.eq.s32.totalorder %s21, 1
      %p60 = por %p58, %p59
      %p61 = scmp.ne.s32.totalorder %s50, %s51
      %p62 = scmp.eq.s32.totalorder %s21, 0
      %p63 = por %p61, %p62
      %p64 = scmp.ne.s32.totalorder %s50, %s51
      %p65 = scmp.eq.s32.totalorder %s22, 1
      %p66 = por %p64, %p65
      %p68 = scmp.ne.s32.totalorder %s51, %s67
      %p69 = scmp.eq.s32.totalorder %s22, 0
      %p70 = por %p68, %p69
      %s71 = ssub.s32 %s25, %s34
      %s72 = ssub.s32 %s24, %s38
      %s73 = sor.u32 %s71, %s72
      %p74 = scmp.eq.s32.totalorder %s73, 0
      %s76 = sadd.s32 %s75, 1
      %s77 = scalar_select %p74, %s75, %s76
      %p80 = pneg %p74
      %p81 = scmp.eq.s32.totalorder %s16, 1
      %p82 = por %p80, %p81
      %p83 = scmp.ne.s32.totalorder %s75, %s78
      %p84 = scmp.eq.s32.totalorder %s16, 0
      %p85 = por %p83, %p84
      %p86 = scmp.ne.s32.totalorder %s75, %s78
      %p87 = scmp.eq.s32.totalorder %s21, 1
      %p88 = por %p86, %p87
      %p89 = scmp.ne.s32.totalorder %s78, %s79
      %p90 = scmp.eq.s32.totalorder %s21, 0
      %p91 = por %p89, %p90
      %p92 = scmp.ne.s32.totalorder %s78, %s79
      %p93 = scmp.eq.s32.totalorder %s22, 1
      %p94 = por %p92, %p93
      %p96 = scmp.ne.s32.totalorder %s79, %s95
      %p97 = scmp.eq.s32.totalorder %s22, 0
      %p98 = por %p96, %p97
      %s99 = ssub.s32 %s24, %s38
      %p100 = scmp.eq.s32.totalorder %s99, 0
      %s102 = sadd.s32 %s101, 1
      %s103 = scalar_select %p100, %s101, %s102
      %p106 = pneg %p100
      %p107 = scmp.eq.s32.totalorder %s16, 1
      %p108 = por %p106, %p107
      %p109 = scmp.ne.s32.totalorder %s101, %s104
      %p110 = scmp.eq.s32.totalorder %s16, 0
      %p111 = por %p109, %p110
      %p112 = scmp.ne.s32.totalorder %s101, %s104
      %p113 = scmp.eq.s32.totalorder %s21, 1
      %p114 = por %p112, %p113
      %p115 = scmp.ne.s32.totalorder %s104, %s105
      %p116 = scmp.eq.s32.totalorder %s21, 0
      %p117 = por %p115, %p116
      %p118 = scmp.ne.s32.totalorder %s104, %s105
      %p119 = scmp.eq.s32.totalorder %s22, 1
      %p120 = por %p118, %p119
      %p122 = scmp.ne.s32.totalorder %s105, %s121
      %p123 = scmp.eq.s32.totalorder %s22, 0
      %p124 = por %p122, %p123
      %s125 = ssub.s32 %s23, %s42
      %s126 = ssub.s32 %s24, %s38
      %s127 = sor.u32 %s125, %s126
      %p128 = scmp.eq.s32.totalorder %s127, 0
      %s130 = sadd.s32 %s129, 1
      %s131 = scalar_select %p128, %s129, %s130
      %p134 = pneg %p128
      %p135 = scmp.eq.s32.totalorder %s16, 1
      %p136 = por %p134, %p135
      %p137 = scmp.ne.s32.totalorder %s129, %s132
      %p138 = scmp.eq.s32.totalorder %s16, 0
      %p139 = por %p137, %p138
      %p140 = scmp.ne.s32.totalorder %s129, %s132
      %p141 = scmp.eq.s32.totalorder %s21, 1
      %p142 = por %p140, %p141
      %p143 = scmp.ne.s32.totalorder %s132, %s133
      %p144 = scmp.eq.s32.totalorder %s21, 0
      %p145 = por %p143, %p144
      %p146 = scmp.ne.s32.totalorder %s132, %s133
      %p147 = scmp.eq.s32.totalorder %s22, 1
      %p148 = por %p146, %p147
      %p150 = scmp.ne.s32.totalorder %s133, %s149
      %p151 = scmp.eq.s32.totalorder %s22, 0
      %p152 = por %p150, %p151
      %p153 = scmp.le.s32.totalorder 1, %s16
      %p154 = scmp.lt.s32.totalorder %s16, 3
      %p155 = pnand %p153, %p154
      %p156 = pneg %p155
      // Predicated region
      $region9: #{nncell_forward.1} parent=5 // pred_check
        _
      $region10: #{nncell_forward.1} parent=5 // pred_check_branch
        %158 = sbr.rel (%p155) target = $region12
      $region11: #{nncell_forward.1} parent=5 // pred_region
        %s159 = ssub.s32 %s16, 1
        // Predicated region
        $region13: #{nncell_forward.1} parent=11 // pred_check
          %p160 = pneg %p63
        $region14: #{nncell_forward.1} parent=11 // pred_check_branch
          %162 = sbr.rel (%p160) target = $region16
        $region15: #{nncell_forward.1} parent=11 // pred_region
          %s163 = smul.u32 2, %s26
          %s164 = smul.u32 8, %s28
          %s166 = ssub.s32 2048, 2048
          %167 = vsyncadd [#allocation3], %s166
          %s168 = smul.addr %s163, 8
          %s169 = sadd.s32 %s164, %s168
          %s170 = smul.addr %s169, 128
          %s171 = scalar_lea.hbm %s0, %s170
          %s172 = sshll.u32 [#allocation2], 4
          %s173 = int_to_ptr.vmem [resolvable:$true] %s172
          %178 = dma.hbm_to_vmem [thread:$0]  %s171, 2048, %s173, [#allocation3], 1024, 1024, 64
        $region16: #{nncell_forward.1} parent=11 // pred_fallthru
          _
      $region12: #{nncell_forward.1} parent=5 // pred_fallthru
        _
      %p179 = scmp.lt.s32.totalorder %s16, 2
      // Predicated region
      $region17: #{nncell_forward.1} parent=5 // pred_check
        %p180 = pneg %p179
      $region18: #{nncell_forward.1} parent=5 // pred_check_branch
        %182 = sbr.rel (%p180) target = $region20
      $region19: #{nncell_forward.1} parent=5 // pred_region
        // Predicated region
        $region21: #{nncell_forward.1} parent=19 // pred_check
          %p183 = pneg %p85
        $region22: #{nncell_forward.1} parent=19 // pred_check_branch
          %185 = sbr.rel (%p183) target = $region24
        $region23: #{nncell_forward.1} parent=19 // pred_region
          %s186 = sand.u32 %s16, 1
          %s187 = scalar_lea.sflag [#allocation6], %s186
          %s188 = sand.u32 %s75, 1
          %s189 = smul.addr %s188, 2048
          %s190 = scalar_lea.vmem [#allocation5], %s189
          %s191 = smul.u32 128, %s25
          %s192 = smul.u32 2, %s24
          %s194 = ssub.s32 32768, 32768
          %195 = vsyncadd %s187, %s194
          %s196 = smul.addr %s191, 4
          %s197 = sadd.s32 %s192, %s196
          %s198 = smul.addr %s197, 128
          %s199 = scalar_lea.hbm %s1, %s198
          %s200 = sshll.u32 %s190, 4
          %s201 = int_to_ptr.vmem [resolvable:$true] %s200
          %206 = dma.hbm_to_vmem [thread:$0]  %s199, 32768, %s201, %s187, 512, 256, 16
        $region24: #{nncell_forward.1} parent=19 // pred_fallthru
          _
        // Predicated region
        $region25: #{nncell_forward.1} parent=19 // pred_check
          %p207 = pneg %p111
        $region26: #{nncell_forward.1} parent=19 // pred_check_branch
          %209 = sbr.rel (%p207) target = $region28
        $region27: #{nncell_forward.1} parent=19 // pred_region
          %s210 = sand.u32 %s16, 1
          %s211 = scalar_lea.sflag [#allocation6], %s210
          %s212 = sand.u32 %s101, 1
          %s213 = smul.addr %s212, 2
          %s214 = scalar_lea.vmem [#allocation7], %s213
          %s215 = smul.u32 2, %s24
          %s217 = ssub.s32 32, 32
          %218 = vsyncadd %s211, %s217
          %s219 = smul.addr %s215, 16
          %s220 = scalar_lea.hbm %s2, %s219
          %s222 = sshll.u32 %s214, 4
          %s223 = int_to_ptr.vmem [resolvable:$true] %s222
          %225 = dma.hbm_to_vmem [thread:$0]  %s220, 32, %s223, %s211
        $region28: #{nncell_forward.1} parent=19 // pred_fallthru
          _
      $region20: #{nncell_forward.1} parent=5 // pred_fallthru
        _
      %p226 = scmp.le.s32.totalorder 1, %s16
      %p227 = scmp.lt.s32.totalorder %s16, 3
      %p228 = pnand %p226, %p227
      %p229 = pneg %p228
      // Predicated region
      $region29: #{nncell_forward.1} parent=5 // pred_check
        _
      $region30: #{nncell_forward.1} parent=5 // pred_check_branch
        %231 = sbr.rel (%p228) target = $region32
      $region31: #{nncell_forward.1} parent=5 // pred_region
        %s232 = ssub.s32 %s16, 1
        // Predicated region
        $region33: #{nncell_forward.1} parent=31 // pred_check
          %p233 = pneg %p63
        $region34: #{nncell_forward.1} parent=31 // pred_check_branch
          %235 = sbr.rel (%p233) target = $region36
        $region35: #{nncell_forward.1} parent=31 // pred_region
          %236 = dma.done [#allocation3], 2048
        $region36: #{nncell_forward.1} parent=31 // pred_fallthru
          _
        %s237 = sand.u32 %s21, 1
        %s238 = scalar_lea.sflag [#allocation6], %s237
        %s239 = sand.u32 %s78, 1
        %s240 = smul.addr %s239, 2048
        %s241 = scalar_lea.vmem [#allocation5], %s240
        // Predicated region
        $region37: #{nncell_forward.1} parent=31 // pred_check
          %p242 = pneg %p91
        $region38: #{nncell_forward.1} parent=31 // pred_check_branch
          %244 = sbr.rel (%p242) target = $region40
        $region39: #{nncell_forward.1} parent=31 // pred_region
          %245 = dma.done %s238, 32768
        $region40: #{nncell_forward.1} parent=31 // pred_fallthru
          _
        %s246 = sand.u32 %s21, 1
        %s247 = scalar_lea.sflag [#allocation6], %s246
        %s248 = sand.u32 %s104, 1
        %s249 = smul.addr %s248, 2
        %s250 = scalar_lea.vmem [#allocation7], %s249
        // Predicated region
        $region41: #{nncell_forward.1} parent=31 // pred_check
          %p251 = pneg %p117
        $region42: #{nncell_forward.1} parent=31 // pred_check_branch
          %253 = sbr.rel (%p251) target = $region44
        $region43: #{nncell_forward.1} parent=31 // pred_region
          %254 = dma.done %s247, 32
        $region44: #{nncell_forward.1} parent=31 // pred_fallthru
          _
        %p255 = pneg %p63
        %p256 = pneg %p60
        %s257 = sand.u32 %s21, 1
        %s258 = scalar_lea.sflag [#allocation6], %s257
        %s259 = sand.u32 %s78, 1
        %s260 = smul.addr %s259, 2048
        %s261 = scalar_lea.vmem [#allocation5], %s260
        %p262 = pneg %p91
        %p263 = pneg %p88
        %s264 = sand.u32 %s21, 1
        %s265 = scalar_lea.sflag [#allocation6], %s264
        %s266 = sand.u32 %s104, 1
        %s267 = smul.addr %s266, 2
        %s268 = scalar_lea.vmem [#allocation7], %s267
        %p269 = pneg %p117
        %p270 = pneg %p114
        %p271 = pneg %p145
        %p272 = pneg %p142
        %s273 = sand.u32 %s132, 1
        %s274 = scalar_lea.sflag [#allocation4], %s273
        %s275 = sand.u32 %s132, 1
        %s276 = smul.addr %s275, 32
        %s277 = scalar_lea.vmem [#allocation8], %s276
        %s278 = smul.u32 2, %s26
        %s279 = smul.u32 8, %s28
        %s280 = smul.u32 128, %s28
        %s281 = smul.u32 2, %s27
        %s282 = smul.u32 2, %s27
        %s283 = smul.u32 2, %s26
        %s284 = smul.u32 2, %s27
        %p285 = scmp.eq.s32.totalorder %s28, 0
        // Predicated region
        $region45: #{nncell_forward.1} parent=31 // pred_check
          %p286 = pneg %p285
        $region46: #{nncell_forward.1} parent=31 // pred_check_branch
          %288 = sbr.rel (%p286) target = $region48
        $region47: #{nncell_forward.1} parent=31 // pred_region
          %289 = vst [vmem:[%s277] sm:$0xff] 0.0
          %290 = vst [vmem:[%s277 + $0x8] sm:$0xff] 0.0
          %291 = vst [vmem:[%s277 + $0x10] sm:$0xff] 0.0
          %292 = vst [vmem:[%s277 + $0x18] sm:$0xff] 0.0
        $region48: #{nncell_forward.1} parent=31 // pred_fallthru
          _
        %v293 = vld [vmem:[%s277] sm:$0xff]
        %v294 = vld [vmem:[%s277 + $0x8] sm:$0xff]
        %v295 = vld [vmem:[%s277 + $0x10] sm:$0xff]
        %v296 = vld [vmem:[%s277 + $0x18] sm:$0xff]
        %v297 = vld [vmem:[#allocation2] sm:$0xff]
        %v298 = vld [vmem:[#allocation2 + $0x8] sm:$0xff]
        %v299 = vld [vmem:[#allocation2 + $0x10] sm:$0xff]
        %v300 = vld [vmem:[#allocation2 + $0x18] sm:$0xff]
        %v301 = vld [vmem:[#allocation2 + $0x20] sm:$0xff]
        %v302 = vld [vmem:[#allocation2 + $0x28] sm:$0xff]
        %v303 = vld [vmem:[#allocation2 + $0x30] sm:$0xff]
        %v304 = vld [vmem:[#allocation2 + $0x38] sm:$0xff]
        %v305 = vld [vmem:[#allocation2 + $0x40] sm:$0xff]
        %v306 = vld [vmem:[#allocation2 + $0x48] sm:$0xff]
        %v307 = vld [vmem:[#allocation2 + $0x50] sm:$0xff]
        %v308 = vld [vmem:[#allocation2 + $0x58] sm:$0xff]
        %v309 = vld [vmem:[#allocation2 + $0x60] sm:$0xff]
        %v310 = vld [vmem:[#allocation2 + $0x68] sm:$0xff]
        %v311 = vld [vmem:[#allocation2 + $0x70] sm:$0xff]
        %v312 = vld [vmem:[#allocation2 + $0x78] sm:$0xff]
        %v313 = vld [vmem:[%s241] sm:$0xff]
        %v314 = vld [vmem:[%s241 + $0x8] sm:$0xff]
        %v315 = vld [vmem:[%s241 + $0x10] sm:$0xff]
        %v316 = vld [vmem:[%s241 + $0x18] sm:$0xff]
        %v317 = vld [vmem:[%s241 + $0x20] sm:$0xff]
        %v318 = vld [vmem:[%s241 + $0x28] sm:$0xff]
        %v319 = vld [vmem:[%s241 + $0x30] sm:$0xff]
        %v320 = vld [vmem:[%s241 + $0x38] sm:$0xff]
        %v321 = vld [vmem:[%s241 + $0x40] sm:$0xff]
        %v322 = vld [vmem:[%s241 + $0x48] sm:$0xff]
        %v323 = vld [vmem:[%s241 + $0x50] sm:$0xff]
        %v324 = vld [vmem:[%s241 + $0x58] sm:$0xff]
        %v325 = vld [vmem:[%s241 + $0x60] sm:$0xff]
        %v326 = vld [vmem:[%s241 + $0x68] sm:$0xff]
        %v327 = vld [vmem:[%s241 + $0x70] sm:$0xff]
        %v328 = vld [vmem:[%s241 + $0x78] sm:$0xff]
        %v329 = vld [vmem:[%s241 + $0x80] sm:$0xff]
        %v330 = vld [vmem:[%s241 + $0x88] sm:$0xff]
        %v331 = vld [vmem:[%s241 + $0x90] sm:$0xff]
        %v332 = vld [vmem:[%s241 + $0x98] sm:$0xff]
        %v333 = vld [vmem:[%s241 + $0xa0] sm:$0xff]
        %v334 = vld [vmem:[%s241 + $0xa8] sm:$0xff]
        %v335 = vld [vmem:[%s241 + $0xb0] sm:$0xff]
        %v336 = vld [vmem:[%s241 + $0xb8] sm:$0xff]
        %v337 = vld [vmem:[%s241 + $0xc0] sm:$0xff]
        %v338 = vld [vmem:[%s241 + $0xc8] sm:$0xff]
        %v339 = vld [vmem:[%s241 + $0xd0] sm:$0xff]
        %v340 = vld [vmem:[%s241 + $0xd8] sm:$0xff]
        %v341 = vld [vmem:[%s241 + $0xe0] sm:$0xff]
        %v342 = vld [vmem:[%s241 + $0xe8] sm:$0xff]
        %v343 = vld [vmem:[%s241 + $0xf0] sm:$0xff]
        %v344 = vld [vmem:[%s241 + $0xf8] sm:$0xff]
        %v345 = vld [vmem:[%s241 + $0x100] sm:$0xff]
        %v346 = vld [vmem:[%s241 + $0x108] sm:$0xff]
        %v347 = vld [vmem:[%s241 + $0x110] sm:$0xff]
        %v348 = vld [vmem:[%s241 + $0x118] sm:$0xff]
        %v349 = vld [vmem:[%s241 + $0x120] sm:$0xff]
        %v350 = vld [vmem:[%s241 + $0x128] sm:$0xff]
        %v351 = vld [vmem:[%s241 + $0x130] sm:$0xff]
        %v352 = vld [vmem:[%s241 + $0x138] sm:$0xff]
        %v353 = vld [vmem:[%s241 + $0x140] sm:$0xff]
        %v354 = vld [vmem:[%s241 + $0x148] sm:$0xff]
        %v355 = vld [vmem:[%s241 + $0x150] sm:$0xff]
        %v356 = vld [vmem:[%s241 + $0x158] sm:$0xff]
        %v357 = vld [vmem:[%s241 + $0x160] sm:$0xff]
        %v358 = vld [vmem:[%s241 + $0x168] sm:$0xff]
        %v359 = vld [vmem:[%s241 + $0x170] sm:$0xff]
        %v360 = vld [vmem:[%s241 + $0x178] sm:$0xff]
        %v361 = vld [vmem:[%s241 + $0x180] sm:$0xff]
        %v362 = vld [vmem:[%s241 + $0x188] sm:$0xff]
        %v363 = vld [vmem:[%s241 + $0x190] sm:$0xff]
        %v364 = vld [vmem:[%s241 + $0x198] sm:$0xff]
        %v365 = vld [vmem:[%s241 + $0x1a0] sm:$0xff]
        %v366 = vld [vmem:[%s241 + $0x1a8] sm:$0xff]
        %v367 = vld [vmem:[%s241 + $0x1b0] sm:$0xff]
        %v368 = vld [vmem:[%s241 + $0x1b8] sm:$0xff]
        %v369 = vld [vmem:[%s241 + $0x1c0] sm:$0xff]
        %v370 = vld [vmem:[%s241 + $0x1c8] sm:$0xff]
        %v371 = vld [vmem:[%s241 + $0x1d0] sm:$0xff]
        %v372 = vld [vmem:[%s241 + $0x1d8] sm:$0xff]
        %v373 = vld [vmem:[%s241 + $0x1e0] sm:$0xff]
        %v374 = vld [vmem:[%s241 + $0x1e8] sm:$0xff]
        %v375 = vld [vmem:[%s241 + $0x1f0] sm:$0xff]
        %v376 = vld [vmem:[%s241 + $0x1f8] sm:$0xff]
        %v377 = vld [vmem:[%s241 + $0x200] sm:$0xff]
        %v378 = vld [vmem:[%s241 + $0x208] sm:$0xff]
        %v379 = vld [vmem:[%s241 + $0x210] sm:$0xff]
        %v380 = vld [vmem:[%s241 + $0x218] sm:$0xff]
        %v381 = vld [vmem:[%s241 + $0x220] sm:$0xff]
        %v382 = vld [vmem:[%s241 + $0x228] sm:$0xff]
        %v383 = vld [vmem:[%s241 + $0x230] sm:$0xff]
        %v384 = vld [vmem:[%s241 + $0x238] sm:$0xff]
        %v385 = vld [vmem:[%s241 + $0x240] sm:$0xff]
        %v386 = vld [vmem:[%s241 + $0x248] sm:$0xff]
        %v387 = vld [vmem:[%s241 + $0x250] sm:$0xff]
        %v388 = vld [vmem:[%s241 + $0x258] sm:$0xff]
        %v389 = vld [vmem:[%s241 + $0x260] sm:$0xff]
        %v390 = vld [vmem:[%s241 + $0x268] sm:$0xff]
        %v391 = vld [vmem:[%s241 + $0x270] sm:$0xff]
        %v392 = vld [vmem:[%s241 + $0x278] sm:$0xff]
        %v393 = vld [vmem:[%s241 + $0x280] sm:$0xff]
        %v394 = vld [vmem:[%s241 + $0x288] sm:$0xff]
        %v395 = vld [vmem:[%s241 + $0x290] sm:$0xff]
        %v396 = vld [vmem:[%s241 + $0x298] sm:$0xff]
        %v397 = vld [vmem:[%s241 + $0x2a0] sm:$0xff]
        %v398 = vld [vmem:[%s241 + $0x2a8] sm:$0xff]
        %v399 = vld [vmem:[%s241 + $0x2b0] sm:$0xff]
        %v400 = vld [vmem:[%s241 + $0x2b8] sm:$0xff]
        %v401 = vld [vmem:[%s241 + $0x2c0] sm:$0xff]
        %v402 = vld [vmem:[%s241 + $0x2c8] sm:$0xff]
        %v403 = vld [vmem:[%s241 + $0x2d0] sm:$0xff]
        %v404 = vld [vmem:[%s241 + $0x2d8] sm:$0xff]
        %v405 = vld [vmem:[%s241 + $0x2e0] sm:$0xff]
        %v406 = vld [vmem:[%s241 + $0x2e8] sm:$0xff]
        %v407 = vld [vmem:[%s241 + $0x2f0] sm:$0xff]
        %v408 = vld [vmem:[%s241 + $0x2f8] sm:$0xff]
        %v409 = vld [vmem:[%s241 + $0x300] sm:$0xff]
        %v410 = vld [vmem:[%s241 + $0x308] sm:$0xff]
        %v411 = vld [vmem:[%s241 + $0x310] sm:$0xff]
        %v412 = vld [vmem:[%s241 + $0x318] sm:$0xff]
        %v413 = vld [vmem:[%s241 + $0x320] sm:$0xff]
        %v414 = vld [vmem:[%s241 + $0x328] sm:$0xff]
        %v415 = vld [vmem:[%s241 + $0x330] sm:$0xff]
        %v416 = vld [vmem:[%s241 + $0x338] sm:$0xff]
        %v417 = vld [vmem:[%s241 + $0x340] sm:$0xff]
        %v418 = vld [vmem:[%s241 + $0x348] sm:$0xff]
        %v419 = vld [vmem:[%s241 + $0x350] sm:$0xff]
        %v420 = vld [vmem:[%s241 + $0x358] sm:$0xff]
        %v421 = vld [vmem:[%s241 + $0x360] sm:$0xff]
        %v422 = vld [vmem:[%s241 + $0x368] sm:$0xff]
        %v423 = vld [vmem:[%s241 + $0x370] sm:$0xff]
        %v424 = vld [vmem:[%s241 + $0x378] sm:$0xff]
        %v425 = vld [vmem:[%s241 + $0x380] sm:$0xff]
        %v426 = vld [vmem:[%s241 + $0x388] sm:$0xff]
        %v427 = vld [vmem:[%s241 + $0x390] sm:$0xff]
        %v428 = vld [vmem:[%s241 + $0x398] sm:$0xff]
        %v429 = vld [vmem:[%s241 + $0x3a0] sm:$0xff]
        %v430 = vld [vmem:[%s241 + $0x3a8] sm:$0xff]
        %v431 = vld [vmem:[%s241 + $0x3b0] sm:$0xff]
        %v432 = vld [vmem:[%s241 + $0x3b8] sm:$0xff]
        %v433 = vld [vmem:[%s241 + $0x3c0] sm:$0xff]
        %v434 = vld [vmem:[%s241 + $0x3c8] sm:$0xff]
        %v435 = vld [vmem:[%s241 + $0x3d0] sm:$0xff]
        %v436 = vld [vmem:[%s241 + $0x3d8] sm:$0xff]
        %v437 = vld [vmem:[%s241 + $0x3e0] sm:$0xff]
        %v438 = vld [vmem:[%s241 + $0x3e8] sm:$0xff]
        %v439 = vld [vmem:[%s241 + $0x3f0] sm:$0xff]
        %v440 = vld [vmem:[%s241 + $0x3f8] sm:$0xff]
        %v441 = vld [vmem:[%s241 + $0x400] sm:$0xff]
        %v442 = vld [vmem:[%s241 + $0x408] sm:$0xff]
        %v443 = vld [vmem:[%s241 + $0x410] sm:$0xff]
        %v444 = vld [vmem:[%s241 + $0x418] sm:$0xff]
        %v445 = vld [vmem:[%s241 + $0x420] sm:$0xff]
        %v446 = vld [vmem:[%s241 + $0x428] sm:$0xff]
        %v447 = vld [vmem:[%s241 + $0x430] sm:$0xff]
        %v448 = vld [vmem:[%s241 + $0x438] sm:$0xff]
        %v449 = vld [vmem:[%s241 + $0x440] sm:$0xff]
        %v450 = vld [vmem:[%s241 + $0x448] sm:$0xff]
        %v451 = vld [vmem:[%s241 + $0x450] sm:$0xff]
        %v452 = vld [vmem:[%s241 + $0x458] sm:$0xff]
        %v453 = vld [vmem:[%s241 + $0x460] sm:$0xff]
        %v454 = vld [vmem:[%s241 + $0x468] sm:$0xff]
        %v455 = vld [vmem:[%s241 + $0x470] sm:$0xff]
        %v456 = vld [vmem:[%s241 + $0x478] sm:$0xff]
        %v457 = vld [vmem:[%s241 + $0x480] sm:$0xff]
        %v458 = vld [vmem:[%s241 + $0x488] sm:$0xff]
        %v459 = vld [vmem:[%s241 + $0x490] sm:$0xff]
        %v460 = vld [vmem:[%s241 + $0x498] sm:$0xff]
        %v461 = vld [vmem:[%s241 + $0x4a0] sm:$0xff]
        %v462 = vld [vmem:[%s241 + $0x4a8] sm:$0xff]
        %v463 = vld [vmem:[%s241 + $0x4b0] sm:$0xff]
        %v464 = vld [vmem:[%s241 + $0x4b8] sm:$0xff]
        %v465 = vld [vmem:[%s241 + $0x4c0] sm:$0xff]
        %v466 = vld [vmem:[%s241 + $0x4c8] sm:$0xff]
        %v467 = vld [vmem:[%s241 + $0x4d0] sm:$0xff]
        %v468 = vld [vmem:[%s241 + $0x4d8] sm:$0xff]
        %v469 = vld [vmem:[%s241 + $0x4e0] sm:$0xff]
        %v470 = vld [vmem:[%s241 + $0x4e8] sm:$0xff]
        %v471 = vld [vmem:[%s241 + $0x4f0] sm:$0xff]
        %v472 = vld [vmem:[%s241 + $0x4f8] sm:$0xff]
        %v473 = vld [vmem:[%s241 + $0x500] sm:$0xff]
        %v474 = vld [vmem:[%s241 + $0x508] sm:$0xff]
        %v475 = vld [vmem:[%s241 + $0x510] sm:$0xff]
        %v476 = vld [vmem:[%s241 + $0x518] sm:$0xff]
        %v477 = vld [vmem:[%s241 + $0x520] sm:$0xff]
        %v478 = vld [vmem:[%s241 + $0x528] sm:$0xff]
        %v479 = vld [vmem:[%s241 + $0x530] sm:$0xff]
        %v480 = vld [vmem:[%s241 + $0x538] sm:$0xff]
        %v481 = vld [vmem:[%s241 + $0x540] sm:$0xff]
        %v482 = vld [vmem:[%s241 + $0x548] sm:$0xff]
        %v483 = vld [vmem:[%s241 + $0x550] sm:$0xff]
        %v484 = vld [vmem:[%s241 + $0x558] sm:$0xff]
        %v485 = vld [vmem:[%s241 + $0x560] sm:$0xff]
        %v486 = vld [vmem:[%s241 + $0x568] sm:$0xff]
        %v487 = vld [vmem:[%s241 + $0x570] sm:$0xff]
        %v488 = vld [vmem:[%s241 + $0x578] sm:$0xff]
        %v489 = vld [vmem:[%s241 + $0x580] sm:$0xff]
        %v490 = vld [vmem:[%s241 + $0x588] sm:$0xff]
        %v491 = vld [vmem:[%s241 + $0x590] sm:$0xff]
        %v492 = vld [vmem:[%s241 + $0x598] sm:$0xff]
        %v493 = vld [vmem:[%s241 + $0x5a0] sm:$0xff]
        %v494 = vld [vmem:[%s241 + $0x5a8] sm:$0xff]
        %v495 = vld [vmem:[%s241 + $0x5b0] sm:$0xff]
        %v496 = vld [vmem:[%s241 + $0x5b8] sm:$0xff]
        %v497 = vld [vmem:[%s241 + $0x5c0] sm:$0xff]
        %v498 = vld [vmem:[%s241 + $0x5c8] sm:$0xff]
        %v499 = vld [vmem:[%s241 + $0x5d0] sm:$0xff]
        %v500 = vld [vmem:[%s241 + $0x5d8] sm:$0xff]
        %v501 = vld [vmem:[%s241 + $0x5e0] sm:$0xff]
        %v502 = vld [vmem:[%s241 + $0x5e8] sm:$0xff]
        %v503 = vld [vmem:[%s241 + $0x5f0] sm:$0xff]
        %v504 = vld [vmem:[%s241 + $0x5f8] sm:$0xff]
        %v505 = vld [vmem:[%s241 + $0x600] sm:$0xff]
        %v506 = vld [vmem:[%s241 + $0x608] sm:$0xff]
        %v507 = vld [vmem:[%s241 + $0x610] sm:$0xff]
        %v508 = vld [vmem:[%s241 + $0x618] sm:$0xff]
        %v509 = vld [vmem:[%s241 + $0x620] sm:$0xff]
        %v510 = vld [vmem:[%s241 + $0x628] sm:$0xff]
        %v511 = vld [vmem:[%s241 + $0x630] sm:$0xff]
        %v512 = vld [vmem:[%s241 + $0x638] sm:$0xff]
        %v513 = vld [vmem:[%s241 + $0x640] sm:$0xff]
        %v514 = vld [vmem:[%s241 + $0x648] sm:$0xff]
        %v515 = vld [vmem:[%s241 + $0x650] sm:$0xff]
        %v516 = vld [vmem:[%s241 + $0x658] sm:$0xff]
        %v517 = vld [vmem:[%s241 + $0x660] sm:$0xff]
        %v518 = vld [vmem:[%s241 + $0x668] sm:$0xff]
        %v519 = vld [vmem:[%s241 + $0x670] sm:$0xff]
        %v520 = vld [vmem:[%s241 + $0x678] sm:$0xff]
        %v521 = vld [vmem:[%s241 + $0x680] sm:$0xff]
        %v522 = vld [vmem:[%s241 + $0x688] sm:$0xff]
        %v523 = vld [vmem:[%s241 + $0x690] sm:$0xff]
        %v524 = vld [vmem:[%s241 + $0x698] sm:$0xff]
        %v525 = vld [vmem:[%s241 + $0x6a0] sm:$0xff]
        %v526 = vld [vmem:[%s241 + $0x6a8] sm:$0xff]
        %v527 = vld [vmem:[%s241 + $0x6b0] sm:$0xff]
        %v528 = vld [vmem:[%s241 + $0x6b8] sm:$0xff]
        %v529 = vld [vmem:[%s241 + $0x6c0] sm:$0xff]
        %v530 = vld [vmem:[%s241 + $0x6c8] sm:$0xff]
        %v531 = vld [vmem:[%s241 + $0x6d0] sm:$0xff]
        %v532 = vld [vmem:[%s241 + $0x6d8] sm:$0xff]
        %v533 = vld [vmem:[%s241 + $0x6e0] sm:$0xff]
        %v534 = vld [vmem:[%s241 + $0x6e8] sm:$0xff]
        %v535 = vld [vmem:[%s241 + $0x6f0] sm:$0xff]
        %v536 = vld [vmem:[%s241 + $0x6f8] sm:$0xff]
        %v537 = vld [vmem:[%s241 + $0x700] sm:$0xff]
        %v538 = vld [vmem:[%s241 + $0x708] sm:$0xff]
        %v539 = vld [vmem:[%s241 + $0x710] sm:$0xff]
        %v540 = vld [vmem:[%s241 + $0x718] sm:$0xff]
        %v541 = vld [vmem:[%s241 + $0x720] sm:$0xff]
        %v542 = vld [vmem:[%s241 + $0x728] sm:$0xff]
        %v543 = vld [vmem:[%s241 + $0x730] sm:$0xff]
        %v544 = vld [vmem:[%s241 + $0x738] sm:$0xff]
        %v545 = vld [vmem:[%s241 + $0x740] sm:$0xff]
        %v546 = vld [vmem:[%s241 + $0x748] sm:$0xff]
        %v547 = vld [vmem:[%s241 + $0x750] sm:$0xff]
        %v548 = vld [vmem:[%s241 + $0x758] sm:$0xff]
        %v549 = vld [vmem:[%s241 + $0x760] sm:$0xff]
        %v550 = vld [vmem:[%s241 + $0x768] sm:$0xff]
        %v551 = vld [vmem:[%s241 + $0x770] sm:$0xff]
        %v552 = vld [vmem:[%s241 + $0x778] sm:$0xff]
        %v553 = vld [vmem:[%s241 + $0x780] sm:$0xff]
        %v554 = vld [vmem:[%s241 + $0x788] sm:$0xff]
        %v555 = vld [vmem:[%s241 + $0x790] sm:$0xff]
        %v556 = vld [vmem:[%s241 + $0x798] sm:$0xff]
        %v557 = vld [vmem:[%s241 + $0x7a0] sm:$0xff]
        %v558 = vld [vmem:[%s241 + $0x7a8] sm:$0xff]
        %v559 = vld [vmem:[%s241 + $0x7b0] sm:$0xff]
        %v560 = vld [vmem:[%s241 + $0x7b8] sm:$0xff]
        %v561 = vld [vmem:[%s241 + $0x7c0] sm:$0xff]
        %v562 = vld [vmem:[%s241 + $0x7c8] sm:$0xff]
        %v563 = vld [vmem:[%s241 + $0x7d0] sm:$0xff]
        %v564 = vld [vmem:[%s241 + $0x7d8] sm:$0xff]
        %v565 = vld [vmem:[%s241 + $0x7e0] sm:$0xff]
        %v566 = vld [vmem:[%s241 + $0x7e8] sm:$0xff]
        %v567 = vld [vmem:[%s241 + $0x7f0] sm:$0xff]
        %v568 = vld [vmem:[%s241 + $0x7f8] sm:$0xff]
        %569 = vmatprep.subr.mxu0 %v314
        %570 = vmatpush1.msra.mxu0 %v313
        %571 = vmatprep.subr.mxu0 %v316
        %572 = vmatpush1.msra.mxu0 %v315
        %573 = vmatprep.subr.mxu0 %v318
        %574 = vmatpush1.msra.mxu0 %v317
        %575 = vmatprep.subr.mxu0 %v320
        %576 = vmatpush1.msra.mxu0 %v319
        %577 = vmatprep.subr.mxu0 %v322
        %578 = vmatpush1.msra.mxu0 %v321
        %579 = vmatprep.subr.mxu0 %v324
        %580 = vmatpush1.msra.mxu0 %v323
        %581 = vmatprep.subr.mxu0 %v326
        %582 = vmatpush1.msra.mxu0 %v325
        %583 = vmatprep.subr.mxu0 %v328
        %584 = vmatpush1.msra.mxu0 %v327
        %585 = vmatprep.subr.mxu0 %v330
        %586 = vmatpush1.msra.mxu0 %v329
        %587 = vmatprep.subr.mxu0 %v332
        %588 = vmatpush1.msra.mxu0 %v331
        %589 = vmatprep.subr.mxu0 %v334
        %590 = vmatpush1.msra.mxu0 %v333
        %591 = vmatprep.subr.mxu0 %v336
        %592 = vmatpush1.msra.mxu0 %v335
        %593 = vmatprep.subr.mxu0 %v338
        %594 = vmatpush1.msra.mxu0 %v337
        %595 = vmatprep.subr.mxu0 %v340
        %596 = vmatpush1.msra.mxu0 %v339
        %597 = vmatprep.subr.mxu0 %v342
        %598 = vmatpush1.msra.mxu0 %v341
        %599 = vmatprep.subr.mxu0 %v344
        %600 = vmatpush1.msra.mxu0 %v343
        %601 = vmatprep.subr.mxu0 %v346
        %602 = vmatpush1.msra.mxu0 %v345
        %603 = vmatprep.subr.mxu0 %v348
        %604 = vmatpush1.msra.mxu0 %v347
        %605 = vmatprep.subr.mxu0 %v350
        %606 = vmatpush1.msra.mxu0 %v349
        %607 = vmatprep.subr.mxu0 %v352
        %608 = vmatpush1.msra.mxu0 %v351
        %609 = vmatprep.subr.mxu0 %v354
        %610 = vmatpush1.msra.mxu0 %v353
        %611 = vmatprep.subr.mxu0 %v356
        %612 = vmatpush1.msra.mxu0 %v355
        %613 = vmatprep.subr.mxu0 %v358
        %614 = vmatpush1.msra.mxu0 %v357
        %615 = vmatprep.subr.mxu0 %v360
        %616 = vmatpush1.msra.mxu0 %v359
        %617 = vmatprep.subr.mxu0 %v362
        %618 = vmatpush1.msra.mxu0 %v361
        %619 = vmatprep.subr.mxu0 %v364
        %620 = vmatpush1.msra.mxu0 %v363
        %621 = vmatprep.subr.mxu0 %v366
        %622 = vmatpush1.msra.mxu0 %v365
        %623 = vmatprep.subr.mxu0 %v368
        %624 = vmatpush1.msra.mxu0 %v367
        %625 = vmatprep.subr.mxu0 %v370
        %626 = vmatpush1.msra.mxu0 %v369
        %627 = vmatprep.subr.mxu0 %v372
        %628 = vmatpush1.msra.mxu0 %v371
        %629 = vmatprep.subr.mxu0 %v374
        %630 = vmatpush1.msra.mxu0 %v373
        %631 = vmatprep.subr.mxu0 %v376
        %632 = vmatpush1.msra.mxu0 %v375
        %633 = vmatprep.mubr.f32.mxu0 %v298
        %634 = vmatmul.mubr.f32.gmra.mrb[0].mxu0 %v297
        %v635 = vpop.f32.mrb[0].mxu0
        %v636 = vadd.f32 0.0, %v635
        %v637 = vpop.f32.mrb[0].mxu0
        %v638 = vadd.f32 0.0, %v637
        %639 = vmatprep.mubr.f32.mxu0 %v306
        %640 = vmatmul.mubr.f32.gmra.mrb[0].mxu0 %v305
        %v641 = vpop.f32.mrb[0].mxu0
        %v642 = vadd.f32 0.0, %v641
        %v643 = vpop.f32.mrb[0].mxu0
        %v644 = vadd.f32 0.0, %v643
        %645 = vdwg.mxu0
        %646 = vmatprep.subr.mxu0 %v378
        %647 = vmatpush1.msra.mxu0 %v377
        %648 = vmatprep.subr.mxu0 %v380
        %649 = vmatpush1.msra.mxu0 %v379
        %650 = vmatprep.subr.mxu0 %v382
        %651 = vmatpush1.msra.mxu0 %v381
        %652 = vmatprep.subr.mxu0 %v384
        %653 = vmatpush1.msra.mxu0 %v383
        %654 = vmatprep.subr.mxu0 %v386
        %655 = vmatpush1.msra.mxu0 %v385
        %656 = vmatprep.subr.mxu0 %v388
        %657 = vmatpush1.msra.mxu0 %v387
        %658 = vmatprep.subr.mxu0 %v390
        %659 = vmatpush1.msra.mxu0 %v389
        %660 = vmatprep.subr.mxu0 %v392
        %661 = vmatpush1.msra.mxu0 %v391
        %662 = vmatprep.subr.mxu0 %v394
        %663 = vmatpush1.msra.mxu0 %v393
        %664 = vmatprep.subr.mxu0 %v396
        %665 = vmatpush1.msra.mxu0 %v395
        %666 = vmatprep.subr.mxu0 %v398
        %667 = vmatpush1.msra.mxu0 %v397
        %668 = vmatprep.subr.mxu0 %v400
        %669 = vmatpush1.msra.mxu0 %v399
        %670 = vmatprep.subr.mxu0 %v402
        %671 = vmatpush1.msra.mxu0 %v401
        %672 = vmatprep.subr.mxu0 %v404
        %673 = vmatpush1.msra.mxu0 %v403
        %674 = vmatprep.subr.mxu0 %v406
        %675 = vmatpush1.msra.mxu0 %v405
        %676 = vmatprep.subr.mxu0 %v408
        %677 = vmatpush1.msra.mxu0 %v407
        %678 = vmatprep.subr.mxu0 %v410
        %679 = vmatpush1.msra.mxu0 %v409
        %680 = vmatprep.subr.mxu0 %v412
        %681 = vmatpush1.msra.mxu0 %v411
        %682 = vmatprep.subr.mxu0 %v414
        %683 = vmatpush1.msra.mxu0 %v413
        %684 = vmatprep.subr.mxu0 %v416
        %685 = vmatpush1.msra.mxu0 %v415
        %686 = vmatprep.subr.mxu0 %v418
        %687 = vmatpush1.msra.mxu0 %v417
        %688 = vmatprep.subr.mxu0 %v420
        %689 = vmatpush1.msra.mxu0 %v419
        %690 = vmatprep.subr.mxu0 %v422
        %691 = vmatpush1.msra.mxu0 %v421
        %692 = vmatprep.subr.mxu0 %v424
        %693 = vmatpush1.msra.mxu0 %v423
        %694 = vmatprep.subr.mxu0 %v426
        %695 = vmatpush1.msra.mxu0 %v425
        %696 = vmatprep.subr.mxu0 %v428
        %697 = vmatpush1.msra.mxu0 %v427
        %698 = vmatprep.subr.mxu0 %v430
        %699 = vmatpush1.msra.mxu0 %v429
        %700 = vmatprep.subr.mxu0 %v432
        %701 = vmatpush1.msra.mxu0 %v431
        %702 = vmatprep.subr.mxu0 %v434
        %703 = vmatpush1.msra.mxu0 %v433
        %704 = vmatprep.subr.mxu0 %v436
        %705 = vmatpush1.msra.mxu0 %v435
        %706 = vmatprep.subr.mxu0 %v438
        %707 = vmatpush1.msra.mxu0 %v437
        %708 = vmatprep.subr.mxu0 %v440
        %709 = vmatpush1.msra.mxu0 %v439
        %710 = vmatprep.mubr.f32.mxu0 %v300
        %711 = vmatmul.mubr.f32.gmra.mrb[0].mxu0 %v299
        %v712 = vpop.f32.mrb[0].mxu0
        %v713 = vadd.f32 %v636, %v712
        %v714 = vpop.f32.mrb[0].mxu0
        %v715 = vadd.f32 %v638, %v714
        %716 = vmatprep.mubr.f32.mxu0 %v308
        %717 = vmatmul.mubr.f32.gmra.mrb[0].mxu0 %v307
        %v718 = vpop.f32.mrb[0].mxu0
        %v719 = vadd.f32 %v642, %v718
        %v720 = vpop.f32.mrb[0].mxu0
        %v721 = vadd.f32 %v644, %v720
        %722 = vdwg.mxu0
        %723 = vmatprep.subr.mxu0 %v442
        %724 = vmatpush1.msra.mxu0 %v441
        %725 = vmatprep.subr.mxu0 %v444
        %726 = vmatpush1.msra.mxu0 %v443
        %727 = vmatprep.subr.mxu0 %v446
        %728 = vmatpush1.msra.mxu0 %v445
        %729 = vmatprep.subr.mxu0 %v448
        %730 = vmatpush1.msra.mxu0 %v447
        %731 = vmatprep.subr.mxu0 %v450
        %732 = vmatpush1.msra.mxu0 %v449
        %733 = vmatprep.subr.mxu0 %v452
        %734 = vmatpush1.msra.mxu0 %v451
        %735 = vmatprep.subr.mxu0 %v454
        %736 = vmatpush1.msra.mxu0 %v453
        %737 = vmatprep.subr.mxu0 %v456
        %738 = vmatpush1.msra.mxu0 %v455
        %739 = vmatprep.subr.mxu0 %v458
        %740 = vmatpush1.msra.mxu0 %v457
        %741 = vmatprep.subr.mxu0 %v460
        %742 = vmatpush1.msra.mxu0 %v459
        %743 = vmatprep.subr.mxu0 %v462
        %744 = vmatpush1.msra.mxu0 %v461
        %745 = vmatprep.subr.mxu0 %v464
        %746 = vmatpush1.msra.mxu0 %v463
        %747 = vmatprep.subr.mxu0 %v466
        %748 = vmatpush1.msra.mxu0 %v465
        %749 = vmatprep.subr.mxu0 %v468
        %750 = vmatpush1.msra.mxu0 %v467
        %751 = vmatprep.subr.mxu0 %v470
        %752 = vmatpush1.msra.mxu0 %v469
        %753 = vmatprep.subr.mxu0 %v472
        %754 = vmatpush1.msra.mxu0 %v471
        %755 = vmatprep.subr.mxu0 %v474
        %756 = vmatpush1.msra.mxu0 %v473
        %757 = vmatprep.subr.mxu0 %v476
        %758 = vmatpush1.msra.mxu0 %v475
        %759 = vmatprep.subr.mxu0 %v478
        %760 = vmatpush1.msra.mxu0 %v477
        %761 = vmatprep.subr.mxu0 %v480
        %762 = vmatpush1.msra.mxu0 %v479
        %763 = vmatprep.subr.mxu0 %v482
        %764 = vmatpush1.msra.mxu0 %v481
        %765 = vmatprep.subr.mxu0 %v484
        %766 = vmatpush1.msra.mxu0 %v483
        %767 = vmatprep.subr.mxu0 %v486
        %768 = vmatpush1.msra.mxu0 %v485
        %769 = vmatprep.subr.mxu0 %v488
        %770 = vmatpush1.msra.mxu0 %v487
        %771 = vmatprep.subr.mxu0 %v490
        %772 = vmatpush1.msra.mxu0 %v489
        %773 = vmatprep.subr.mxu0 %v492
        %774 = vmatpush1.msra.mxu0 %v491
        %775 = vmatprep.subr.mxu0 %v494
        %776 = vmatpush1.msra.mxu0 %v493
        %777 = vmatprep.subr.mxu0 %v496
        %778 = vmatpush1.msra.mxu0 %v495
        %779 = vmatprep.subr.mxu0 %v498
        %780 = vmatpush1.msra.mxu0 %v497
        %781 = vmatprep.subr.mxu0 %v500
        %782 = vmatpush1.msra.mxu0 %v499
        %783 = vmatprep.subr.mxu0 %v502
        %784 = vmatpush1.msra.mxu0 %v501
        %785 = vmatprep.subr.mxu0 %v504
        %786 = vmatpush1.msra.mxu0 %v503
        %787 = vmatprep.mubr.f32.mxu0 %v302
        %788 = vmatmul.mubr.f32.gmra.mrb[0].mxu0 %v301
        %v789 = vpop.f32.mrb[0].mxu0
        %v790 = vadd.f32 %v713, %v789
        %v791 = vpop.f32.mrb[0].mxu0
        %v792 = vadd.f32 %v715, %v791
        %793 = vmatprep.mubr.f32.mxu0 %v310
        %794 = vmatmul.mubr.f32.gmra.mrb[0].mxu0 %v309
        %v795 = vpop.f32.mrb[0].mxu0
        %v796 = vadd.f32 %v719, %v795
        %v797 = vpop.f32.mrb[0].mxu0
        %v798 = vadd.f32 %v721, %v797
        %799 = vdwg.mxu0
        %800 = vmatprep.subr.mxu0 %v506
        %801 = vmatpush1.msra.mxu0 %v505
        %802 = vmatprep.subr.mxu0 %v508
        %803 = vmatpush1.msra.mxu0 %v507
        %804 = vmatprep.subr.mxu0 %v510
        %805 = vmatpush1.msra.mxu0 %v509
        %806 = vmatprep.subr.mxu0 %v512
        %807 = vmatpush1.msra.mxu0 %v511
        %808 = vmatprep.subr.mxu0 %v514
        %809 = vmatpush1.msra.mxu0 %v513
        %810 = vmatprep.subr.mxu0 %v516
        %811 = vmatpush1.msra.mxu0 %v515
        %812 = vmatprep.subr.mxu0 %v518
        %813 = vmatpush1.msra.mxu0 %v517
        %814 = vmatprep.subr.mxu0 %v520
        %815 = vmatpush1.msra.mxu0 %v519
        %816 = vmatprep.subr.mxu0 %v522
        %817 = vmatpush1.msra.mxu0 %v521
        %818 = vmatprep.subr.mxu0 %v524
        %819 = vmatpush1.msra.mxu0 %v523
        %820 = vmatprep.subr.mxu0 %v526
        %821 = vmatpush1.msra.mxu0 %v525
        %822 = vmatprep.subr.mxu0 %v528
        %823 = vmatpush1.msra.mxu0 %v527
        %824 = vmatprep.subr.mxu0 %v530
        %825 = vmatpush1.msra.mxu0 %v529
        %826 = vmatprep.subr.mxu0 %v532
        %827 = vmatpush1.msra.mxu0 %v531
        %828 = vmatprep.subr.mxu0 %v534
        %829 = vmatpush1.msra.mxu0 %v533
        %830 = vmatprep.subr.mxu0 %v536
        %831 = vmatpush1.msra.mxu0 %v535
        %832 = vmatprep.subr.mxu0 %v538
        %833 = vmatpush1.msra.mxu0 %v537
        %834 = vmatprep.subr.mxu0 %v540
        %835 = vmatpush1.msra.mxu0 %v539
        %836 = vmatprep.subr.mxu0 %v542
        %837 = vmatpush1.msra.mxu0 %v541
        %838 = vmatprep.subr.mxu0 %v544
        %839 = vmatpush1.msra.mxu0 %v543
        %840 = vmatprep.subr.mxu0 %v546
        %841 = vmatpush1.msra.mxu0 %v545
        %842 = vmatprep.subr.mxu0 %v548
        %843 = vmatpush1.msra.mxu0 %v547
        %844 = vmatprep.subr.mxu0 %v550
        %845 = vmatpush1.msra.mxu0 %v549
        %846 = vmatprep.subr.mxu0 %v552
        %847 = vmatpush1.msra.mxu0 %v551
        %848 = vmatprep.subr.mxu0 %v554
        %849 = vmatpush1.msra.mxu0 %v553
        %850 = vmatprep.subr.mxu0 %v556
        %851 = vmatpush1.msra.mxu0 %v555
        %852 = vmatprep.subr.mxu0 %v558
        %853 = vmatpush1.msra.mxu0 %v557
        %854 = vmatprep.subr.mxu0 %v560
        %855 = vmatpush1.msra.mxu0 %v559
        %856 = vmatprep.subr.mxu0 %v562
        %857 = vmatpush1.msra.mxu0 %v561
        %858 = vmatprep.subr.mxu0 %v564
        %859 = vmatpush1.msra.mxu0 %v563
        %860 = vmatprep.subr.mxu0 %v566
        %861 = vmatpush1.msra.mxu0 %v565
        %862 = vmatprep.subr.mxu0 %v568
        %863 = vmatpush1.msra.mxu0 %v567
        %864 = vmatprep.mubr.f32.mxu0 %v304
        %865 = vmatmul.mubr.f32.gmra.mrb[0].mxu0 %v303
        %v866 = vpop.f32.mrb[0].mxu0
        %v867 = vadd.f32 %v790, %v866
        %v868 = vpop.f32.mrb[0].mxu0
        %v869 = vadd.f32 %v792, %v868
        %870 = vmatprep.mubr.f32.mxu0 %v312
        %871 = vmatmul.mubr.f32.gmra.mrb[0].mxu0 %v311
        %v872 = vpop.f32.mrb[0].mxu0
        %v873 = vadd.f32 %v796, %v872
        %v874 = vpop.f32.mrb[0].mxu0
        %v875 = vadd.f32 %v798, %v874
        %876 = vdwg.mxu0
        %v877 = vadd.f32 %v293, %v867
        %v878 = vadd.f32 %v294, %v869
        %v879 = vadd.f32 %v295, %v873
        %v880 = vadd.f32 %v296, %v875
        %881 = vst [vmem:[%s277] sm:$0xff] %v877
        %882 = vst [vmem:[%s277 + $0x8] sm:$0xff] %v878
        %883 = vst [vmem:[%s277 + $0x10] sm:$0xff] %v879
        %884 = vst [vmem:[%s277 + $0x18] sm:$0xff] %v880
        // Predicated region
        $region49: #{nncell_forward.1} parent=31 // pred_check
          %p885 = pneg %p285
        $region50: #{nncell_forward.1} parent=31 // pred_check_branch
          %887 = sbr.rel (%p885) target = $region52
        $region51: #{nncell_forward.1} parent=31 // pred_region
          %v888 = vld [vmem:[%s277] sm:$0xff]
          %v889 = vld [vmem:[%s277 + $0x8] sm:$0xff]
          %v890 = vld [vmem:[%s277 + $0x10] sm:$0xff]
          %v891 = vld [vmem:[%s277 + $0x18] sm:$0xff]
          %v892 = vld [vmem:[%s250] sm:$0x3]
          %v894 = vlaneseq
          %v895 = vshrl.u32 %v894, 7
          %v896 = vsub.s32 0, %v895
          %v897 = vrot.slane %v892, %v896
          %v898 = vlaneseq
          %v899 = vshrl.u32 %v898, 7
          %v900 = vsub.s32 1, %v899
          %v901 = vrot.slane %v892, %v900
          %v904 = vadd.f32 %v888, %v897
          %v905 = vadd.f32 %v889, %v901
          %v906 = vadd.f32 %v890, %v897
          %v907 = vadd.f32 %v891, %v901
          %908 = vst [vmem:[%s277] sm:$0xff] %v904
          %909 = vst [vmem:[%s277 + $0x8] sm:$0xff] %v905
          %910 = vst [vmem:[%s277 + $0x10] sm:$0xff] %v906
          %911 = vst [vmem:[%s277 + $0x18] sm:$0xff] %v907
        $region52: #{nncell_forward.1} parent=31 // pred_fallthru
          _
        %s912 = sand.u32 %s132, 1
        %s913 = scalar_lea.sflag [#allocation4], %s912
        %s914 = sand.u32 %s132, 1
        %s915 = smul.addr %s914, 32
        %s916 = scalar_lea.vmem [#allocation8], %s915
        // Predicated region
        $region53: #{nncell_forward.1} parent=31 // pred_check
          %p917 = pneg %p142
        $region54: #{nncell_forward.1} parent=31 // pred_check_branch
          %919 = sbr.rel (%p917) target = $region56
        $region55: #{nncell_forward.1} parent=31 // pred_region
          %s920 = smul.u32 2, %s26
          %s921 = smul.u32 2, %s27
          %s923 = ssub.s32 512, 512
          %924 = vsyncadd %s913, %s923
          %s925 = smul.addr %s920, 4
          %s926 = sadd.s32 %s921, %s925
          %s927 = smul.addr %s926, 128
          %s928 = scalar_lea.hbm %s3, %s927
          %s929 = sshll.u32 %s916, 4
          %s930 = int_to_ptr.vmem [resolvable:$true] %s929
          %935 = dma.vmem_to_hbm [thread:$0]  %s930, 512, %s928, %s913, 256, 512, 16
        $region56: #{nncell_forward.1} parent=31 // pred_fallthru
          _
      $region32: #{nncell_forward.1} parent=5 // pred_fallthru
        _
      %p936 = scmp.le.s32.totalorder 2, %s16
      // Predicated region
      $region57: #{nncell_forward.1} parent=5 // pred_check
        %p937 = pneg %p936
      $region58: #{nncell_forward.1} parent=5 // pred_check_branch
        %939 = sbr.rel (%p937) target = $region60
      $region59: #{nncell_forward.1} parent=5 // pred_region
        %s940 = ssub.s32 %s16, 2
        // Predicated region
        $region61: #{nncell_forward.1} parent=59 // pred_check
          %p941 = pneg %p148
        $region62: #{nncell_forward.1} parent=59 // pred_check_branch
          %943 = sbr.rel (%p941) target = $region64
        $region63: #{nncell_forward.1} parent=59 // pred_region
          %s944 = sand.u32 %s133, 1
          %s945 = scalar_lea.sflag [#allocation4], %s944
          %s946 = sand.u32 %s133, 1
          %s947 = smul.addr %s946, 32
          %s948 = scalar_lea.vmem [#allocation8], %s947
          %949 = dma.done %s945, 512
        $region64: #{nncell_forward.1} parent=59 // pred_fallthru
          _
      $region60: #{nncell_forward.1} parent=5 // pred_fallthru
        _
    $region6: #{nncell_forward.1} parent=1 // loop_footer
      %s20 = sadd.s32 1, %s16
    $region7: #{nncell_forward.1} parent=1 // loop_footer_branch
      %15 = sbr.rel target = $region3
    $region8: #{nncell_forward.1} parent=1 // loop_exit
      _
    %950 = vsyncpa [#allocation3], 1
    %s951 = scalar_lea.sflag [#allocation3], 1
    %952 = vsyncpa %s951, 1
    %953 = vsyncpa [#allocation6], 1
    %s954 = scalar_lea.sflag [#allocation6], 1
    %955 = vsyncpa %s954, 1
    %956 = vsyncpa [#allocation4], 1
    %s957 = scalar_lea.sflag [#allocation4], 1
    %958 = vsyncpa %s957, 1

</llo_original>
